<compile_context>
chip_gen: v7x
topology: tpu7x:2x2x1
jax: 0.10.0
libtpu: 0.0.40
codegen_flags: <defaults>
</compile_context>

<pallas_src>
import jax
import jax.numpy as jnp
from jax.experimental import pallas as pl
from jax.experimental.pallas import tpu as pltpu

_NEG = -1e30  # mask value folded into the dense edge bias (representable in bf16)


# ---------------------------------------------------------------------------
# Kernel 1: node projection + per-node attention coefficients (runs once,
#           tiled over node rows).  attm is a block-diagonal packing of
#           att_src/att_dst so both coefficient sets come from one matmul.
# ---------------------------------------------------------------------------
def _proj_kernel(x_ref, w_ref, attm_ref, xw_ref, a_ref):
    xw = jnp.dot(x_ref[...], w_ref[...], preferred_element_type=jnp.float32)  # [T, H*D]
    xw_ref[...] = xw
    a_ref[...] = jnp.dot(xw, attm_ref[...], preferred_element_type=jnp.float32)  # [T, 2H]


# ---------------------------------------------------------------------------
# Kernel 2: dense masked attention over a tile of dst rows.
#   e[h,i,j] = LeakyReLU_0.2( a_dst[i,h] + a_src[h,j] + ea[h,i,j] )
#   softmax over j (mask already folded into ea as -1e30), aggregate xw, bias,
#   outer LeakyReLU(0.01).
# ---------------------------------------------------------------------------
def _gat_attn_kernel(xw_ref, asrc_ref, adst_ref, bias_ref, ea_ref, out_ref):
    H = asrc_ref.shape[0]
    D = xw_ref.shape[1] // H

    xw = xw_ref[...]            # [N, H*D] f32, resident across all dst tiles
    a_src = asrc_ref[...]       # [H, N]   f32
    a_dst = adst_ref[...]       # [T, H]   f32

    head_outs = []
    for h in range(H):          # static, small H
        e = (a_dst[:, h:h + 1] + a_src[h:h + 1, :]
             + ea_ref[h].astype(jnp.float32))               # [T, N]
        e = jnp.where(e >= 0, e, 0.2 * e)                    # GATConv LeakyReLU(0.2)
        m = jnp.max(e, axis=-1, keepdims=True)
        p = jnp.exp(e - m)                                   # masked entries -> exactly 0
        s = jnp.sum(p, axis=-1, keepdims=True)

        xh = xw[:, h * D:(h + 1) * D].astype(jnp.bfloat16)   # [N, D]
        acc = jnp.dot(p.astype(jnp.bfloat16), xh,            # bf16 MXU, f32 accumulate
                      preferred_element_type=jnp.float32)    # [T, D]
        # deferred softmax normalization: EUP reciprocal, not an NxN VPU divide
        head_outs.append(acc * pl.reciprocal(jnp.maximum(s, 1e-16), approx=True))

    out = jnp.concatenate(head_outs, axis=1) + bias_ref[...]  # [T, H*D], single store
    out_ref[...] = jnp.where(out >= 0, out, 0.01 * out)       # outer nn.LeakyReLU(0.01)


# ---------------------------------------------------------------------------
# Wrapper (glue): parameters, self loops, edge-bias densification, kernel calls.
# ---------------------------------------------------------------------------
def _pick_dst_tile(n):
    # v7x (64 MiB VMEM): keep dst tiles <= 256; v5e/v6e (128 MiB) can go to 512.
    for t in (256, 128):
        if n % t == 0:
            return t
    return n  # small / odd N: one full block (block == full dims is always legal)


def init_gat_params(key, features, hidden, heads, edge_dim):
    k = jax.random.split(key, 6)
    s = 0.1
    return {
        "w_src":    s * jax.random.normal(k[0], (features, heads * hidden), jnp.float32),
        "w_edge":   s * jax.random.normal(k[1], (edge_dim, heads * hidden), jnp.float32),
        "att_src":  s * jax.random.normal(k[2], (heads, hidden), jnp.float32),
        "att_dst":  s * jax.random.normal(k[3], (heads, hidden), jnp.float32),
        "att_edge": s * jax.random.normal(k[4], (heads, hidden), jnp.float32),
        "bias":     s * jax.random.normal(k[5], (heads * hidden,), jnp.float32),
    }


def gat_layer_forward(params, node_features, edge_index, edge_attr):
    N, F = node_features.shape
    H, D = params["att_src"].shape
    HD = H * D
    edge_dim = edge_attr.shape[1]
    src, dst = edge_index[0], edge_index[1]

    # --- add self loops, edge_attr fill_value='mean' (PyG GATConv default) ---
    deg = jnp.zeros((N,), jnp.float32).at[dst].add(1.0)
    sums = jnp.zeros((N, edge_dim), jnp.float32).at[dst].add(edge_attr)
    loop_attr = sums / jnp.maximum(deg, 1.0)[:, None]
    src_full = jnp.concatenate([src, jnp.arange(N, dtype=src.dtype)])
    dst_full = jnp.concatenate([dst, jnp.arange(N, dtype=dst.dtype)])
    eattr_full = jnp.concatenate([edge_attr, loop_attr], axis=0)
    E = eattr_full.shape[0]

    # --- per-edge, per-head contribution from edge attrs (plain-JAX glue) ---
    ew = (eattr_full @ params["w_edge"]).reshape(E, H, D)
    ea = jnp.sum(ew * params["att_edge"][None], axis=-1)          # [E, H]

    # --- dense per-head edge bias with the adjacency mask folded in ---------
    # Non-edges get -1e30 (exp underflows to 0; every dst row has a self loop).
    # NOTE: assumes no duplicate (src, dst) edges (duplicates would be dropped).
    ea_dense = jnp.full((H, N, N), _NEG, jnp.bfloat16)
    ea_dense = ea_dense.at[:, dst_full, src_full].set(ea.T.astype(jnp.bfloat16))

    # block-diagonal packing so a_src/a_dst come out of one lane-dense matmul
    rows = jnp.arange(HD)
    cols = jnp.repeat(jnp.arange(H), D)
    att_src_mat = jnp.zeros((HD, H), jnp.float32).at[rows, cols].set(
        params["att_src"].reshape(-1))
    att_dst_mat = jnp.zeros((HD, H), jnp.float32).at[rows, cols].set(
        params["att_dst"].reshape(-1))
    attm = jnp.concatenate([att_src_mat, att_dst_mat], axis=1)    # [H*D, 2H]

    tile = _pick_dst_tile(N)
    grid = (N // tile,)
    cparams = pltpu.CompilerParams(
        dimension_semantics=("parallel",),            # shard dst tiles on v7x's 2 TCs
        vmem_limit_bytes=48 * 1024 * 1024)            # > 32 MiB scoped default, < v7x 64 MiB

    # --- kernel 1: projection + attention coefficients (computed once) ------
    xw, a = pl.pallas_call(
        _proj_kernel,
        out_shape=(jax.ShapeDtypeStruct((N, HD), jnp.float32),
                   jax.ShapeDtypeStruct((N, 2 * H), jnp.float32)),
        grid=grid,
        in_specs=[pl.BlockSpec((tile, F), lambda i: (i, 0)),
                  pl.BlockSpec((F, HD), lambda i: (0, 0)),
                  pl.BlockSpec((HD, 2 * H), lambda i: (0, 0))],
        out_specs=(pl.BlockSpec((tile, HD), lambda i: (i, 0)),
                   pl.BlockSpec((tile, 2 * H), lambda i: (i, 0))),
        compiler_params=cparams,
    )(node_features, params["w_src"], attm)

    a_src_hn = a[:, :H].T               # [H, N] (glue transpose, lane-dense for kernel 2)
    a_dst_nh = a[:, H:]                 # [N, H]
    bias2d = params["bias"].reshape(1, HD)

    # --- kernel 2: dst-tiled masked attention + aggregation + activation ----
    out = pl.pallas_call(
        _gat_attn_kernel,
        out_shape=jax.ShapeDtypeStruct((N, HD), jnp.float32),
        grid=grid,
        in_specs=[pl.BlockSpec((N, HD), lambda i: (0, 0)),          # xw (resident)
                  pl.BlockSpec((H, N), lambda i: (0, 0)),           # a_src row vector
                  pl.BlockSpec((tile, H), lambda i: (i, 0)),        # a_dst per tile
                  pl.BlockSpec((1, HD), lambda i: (0, 0)),          # bias
                  pl.BlockSpec((H, tile, N), lambda i: (0, i, 0))], # edge bias (+mask)
        out_specs=pl.BlockSpec((tile, HD), lambda i: (i, 0)),
        compiler_params=cparams,
    )(xw, a_src_hn, a_dst_nh, bias2d, ea_dense)

    # Dropout: inference-mode identity.
    # TODO(synk): training-mode dropout would need an RNG mask; eval semantics kept.
    return out


if __name__ == "__main__":
    features, hidden, heads, edge_dim, dropout = 8, 8, 2, 4, 0.1
    N = 512  # -> dst tile 256, grid of 2 (exercises the tiled / pipelined path)

    key = jax.random.PRNGKey(0)
    k_param, k_x, k_e = jax.random.split(key, 3)

    params = init_gat_params(k_param, features, hidden, heads, edge_dim)
    node_features = jax.random.normal(k_x, (N, features), jnp.float32)

    # deterministic ring graph (both directions): 2N edges, no duplicates
    idx = jnp.arange(N, dtype=jnp.int32)
    src = jnp.concatenate([idx, (idx + 1) % N])
    dst = jnp.concatenate([(idx + 1) % N, idx])
    edge_index = jnp.stack([src, dst], axis=0)                     # [2, 2N]
    edge_attr = jax.random.normal(k_e, (edge_index.shape[1], edge_dim), jnp.float32)

    out = gat_layer_forward(params, node_features, edge_index, edge_attr)
    out = jax.block_until_ready(out)
    assert out.shape == (N, heads * hidden)
    assert bool(jnp.all(jnp.isfinite(out)))
    print("KERNEL_OK")
</pallas_src>

<mosaic_0001>
module attributes {stable_mosaic.version = 11 : i64} {
  func.func @_proj_kernel(%arg0: i32, %arg1: memref<256x8xf32, #tpu.memory_space<vmem>>, %arg2: memref<8x16xf32, #tpu.memory_space<vmem>>, %arg3: memref<16x4xf32, #tpu.memory_space<vmem>>, %arg4: memref<256x16xf32, #tpu.memory_space<vmem>>, %arg5: memref<256x4xf32, #tpu.memory_space<vmem>>) attributes {dimension_semantics = [#tpu.dimension_semantics<parallel>], iteration_bounds = array<i64: 2>, scalar_prefetch = 0 : i64, scratch_operands = 0 : i64, tpu.core_type = #tpu.core_type<tc>, window_params = [{transform_indices = @transform_0, window_bounds = array<i64: 256, 8>}, {pipeline_mode = #tpu.pipeline_mode<synchronous>, transform_indices = @transform_1, window_bounds = array<i64: 8, 16>}, {pipeline_mode = #tpu.pipeline_mode<synchronous>, transform_indices = @transform_2, window_bounds = array<i64: 16, 4>}, {transform_indices = @transform_3, window_bounds = array<i64: 256, 16>}, {transform_indices = @transform_4, window_bounds = array<i64: 256, 4>}]} {
    %c0 = arith.constant 0 : index
    %c0_0 = arith.constant 0 : index
    %0 = vector.load %arg1[%c0, %c0_0] : memref<256x8xf32, #tpu.memory_space<vmem>>, vector<256x8xf32>
    %c0_1 = arith.constant 0 : index
    %c0_2 = arith.constant 0 : index
    %1 = vector.load %arg2[%c0_1, %c0_2] : memref<8x16xf32, #tpu.memory_space<vmem>>, vector<8x16xf32>
    %cst = arith.constant dense<0.000000e+00> : vector<256x16xf32>
    %2 = tpu.matmul %0, %1, %cst {dimension_numbers = #tpu.dot_dimension_numbers<[1], [0], [0], [1], [0, 0, 1, 1], [], []>} : vector<256x8xf32>, vector<8x16xf32>, vector<256x16xf32> -> vector<256x16xf32>
    %c0_3 = arith.constant 0 : index
    %c0_4 = arith.constant 0 : index
    %3 = vector.load %arg4[%c0_3, %c0_4] : memref<256x16xf32, #tpu.memory_space<vmem>>, vector<256x16xf32>
    tpu.vector_store %arg4[%c0_3, %c0_4], %2 {strides = array<i32>} : memref<256x16xf32, #tpu.memory_space<vmem>>, vector<256x16xf32>,
    %c0_5 = arith.constant 0 : index
    %c0_6 = arith.constant 0 : index
    %4 = vector.load %arg3[%c0_5, %c0_6] : memref<16x4xf32, #tpu.memory_space<vmem>>, vector<16x4xf32>
    %cst_7 = arith.constant dense<0.000000e+00> : vector<256x4xf32>
    %5 = tpu.matmul %2, %4, %cst_7 {dimension_numbers = #tpu.dot_dimension_numbers<[1], [0], [0], [1], [0, 0, 1, 1], [], []>} : vector<256x16xf32>, vector<16x4xf32>, vector<256x4xf32> -> vector<256x4xf32>
    %c0_8 = arith.constant 0 : index
    %c0_9 = arith.constant 0 : index
    %6 = vector.load %arg5[%c0_8, %c0_9] : memref<256x4xf32, #tpu.memory_space<vmem>>, vector<256x4xf32>
    tpu.vector_store %arg5[%c0_8, %c0_9], %5 {strides = array<i32>} : memref<256x4xf32, #tpu.memory_space<vmem>>, vector<256x4xf32>,
    return
  }
  func.func @transform_0(%arg0: i32) -> (i32, i32) {
    %c0_i32 = arith.constant 0 : i32
    %c0_i32_0 = arith.constant 0 : i32
    return %arg0, %c0_i32 : i32, i32
  }
  func.func @transform_1(%arg0: i32) -> (i32, i32) {
    %c0_i32 = arith.constant 0 : i32
    %c0_i32_0 = arith.constant 0 : i32
    %c0_i32_1 = arith.constant 0 : i32
    return %c0_i32, %c0_i32_0 : i32, i32
  }
  func.func @transform_2(%arg0: i32) -> (i32, i32) {
    %c0_i32 = arith.constant 0 : i32
    %c0_i32_0 = arith.constant 0 : i32
    %c0_i32_1 = arith.constant 0 : i32
    return %c0_i32, %c0_i32_0 : i32, i32
  }
  func.func @transform_3(%arg0: i32) -> (i32, i32) {
    %c0_i32 = arith.constant 0 : i32
    %c0_i32_0 = arith.constant 0 : i32
    return %arg0, %c0_i32 : i32, i32
  }
  func.func @transform_4(%arg0: i32) -> (i32, i32) {
    %c0_i32 = arith.constant 0 : i32
    %c0_i32_0 = arith.constant 0 : i32
    return %arg0, %c0_i32 : i32, i32
  }
}

</mosaic_0001>

<llo_original>
// kernel: tpu_custom_call.1
$region0: #{tpu_custom_call.1}
  #allocation0 [shape = 'u32[]', space=smem, size = 0x4, offset = 0x4, fixed_abs, tag = 'smem constant byte address 0x4 - core index']
  #allocation1 [shape = 'u32[144,128]{1,0:T(1,128)}', space=vmem, size = 0x12000, scoped, tag = 'internal scratch']
  %s0 = inlined_call_operand.vmem [shape: f32[512,8], index: 0, kind: input, shape index: {}]
  %s1 = inlined_call_operand.vmem [shape: f32[8,16], index: 1, kind: input, shape index: {}]
  %s2 = inlined_call_operand.vmem [shape: f32[16,4], index: 2, kind: input, shape index: {}]
  %s3 = inlined_call_operand.vmem [shape: f32[512,16], index: 3, kind: output, shape index: {0}]
  %s4 = inlined_call_operand.vmem [shape: f32[512,4], index: 4, kind: output, shape index: {1}]
  %5 = xla_tuple %s3, %s4
  %s6 = sld [smem:[#allocation0]]
  $region53: #{tpu_custom_call.1} parent=0
    _
  %s8 = ssub.s32 1, %s6
  %s9 = scalar_select 0, %s8, %s6
  loop: start=0, step=1, limit=4
  $region2: #{tpu_custom_call.1} parent=0 // loop_pre_header
    _
  $region3: #{tpu_custom_call.1} parent=0 // loop_header
    %s11 = sphi 0, %s15
    %p12 = scmp.ge.s32.totalorder %s11, 4
    %s21 = sphi 0, %s23
    %s24 = sphi 0, %s21
    %s25 = sphi 0, %s24
    %s41 = sphi 0, %s25
    %s45 = sphi 0, %s45
    %s47 = sphi 0, %s45
    %s48 = sphi 0, %s47
    %s62 = sphi 0, %s48
    %s66 = sphi 0, %s66
    %s68 = sphi 0, %s66
    %s69 = sphi 0, %s68
    %s83 = sphi 0, %s69
    %s89 = sphi 0, %s91
    %s92 = sphi 0, %s89
    %s93 = sphi 0, %s92
    %s109 = sphi 0, %s93
    %s115 = sphi 0, %s117
    %s118 = sphi 0, %s115
    %s119 = sphi 0, %s118
    %s135 = sphi 0, %s119
  $region4: #{tpu_custom_call.1} parent=0 // loop_header_branch
    %14 = sbr.rel (%p12) target = $region8
  $region5: #{tpu_custom_call.1} parent=0 // loop_body
    %s16 = ssub.s32 %s11, 1
    %s17 = ssub.s32 %s11, 2
    %s18 = sadd.s32 %s11, 1
    %s19 = ssub.s32 %s11, %s18
    %p20 = scmp.eq.s32.totalorder %s19, 0
    %s22 = sadd.s32 %s21, 1
    %s23 = scalar_select %p20, %s21, %s22
    %p26 = pneg %p20
    %p27 = scmp.eq.s32.totalorder %s11, 1
    %p28 = por %p26, %p27
    %p29 = scmp.ne.s32.totalorder %s21, %s24
    %p30 = scmp.eq.s32.totalorder %s11, 0
    %p31 = por %p29, %p30
    %p32 = scmp.ne.s32.totalorder %s21, %s24
    %p33 = scmp.eq.s32.totalorder %s16, 1
    %p34 = por %p32, %p33
    %p35 = scmp.ne.s32.totalorder %s24, %s25
    %p36 = scmp.eq.s32.totalorder %s16, 0
    %p37 = por %p35, %p36
    %p38 = scmp.ne.s32.totalorder %s24, %s25
    %p39 = scmp.eq.s32.totalorder %s17, 1
    %p40 = por %p38, %p39
    %p42 = scmp.ne.s32.totalorder %s25, %s41
    %p43 = scmp.eq.s32.totalorder %s17, 0
    %p44 = por %p42, %p43
    %s46 = sadd.s32 %s45, 1
    %p49 = scmp.eq.s32.totalorder %s11, 1
    %p50 = scmp.ne.s32.totalorder %s45, %s47
    %p51 = scmp.eq.s32.totalorder %s11, 0
    %p52 = por %p50, %p51
    %p53 = scmp.ne.s32.totalorder %s45, %s47
    %p54 = scmp.eq.s32.totalorder %s16, 1
    %p55 = por %p53, %p54
    %p56 = scmp.ne.s32.totalorder %s47, %s48
    %p57 = scmp.eq.s32.totalorder %s16, 0
    %p58 = por %p56, %p57
    %p59 = scmp.ne.s32.totalorder %s47, %s48
    %p60 = scmp.eq.s32.totalorder %s17, 1
    %p61 = por %p59, %p60
    %p63 = scmp.ne.s32.totalorder %s48, %s62
    %p64 = scmp.eq.s32.totalorder %s17, 0
    %p65 = por %p63, %p64
    %s67 = sadd.s32 %s66, 1
    %p70 = scmp.eq.s32.totalorder %s11, 1
    %p71 = scmp.ne.s32.totalorder %s66, %s68
    %p72 = scmp.eq.s32.totalorder %s11, 0
    %p73 = por %p71, %p72
    %p74 = scmp.ne.s32.totalorder %s66, %s68
    %p75 = scmp.eq.s32.totalorder %s16, 1
    %p76 = por %p74, %p75
    %p77 = scmp.ne.s32.totalorder %s68, %s69
    %p78 = scmp.eq.s32.totalorder %s16, 0
    %p79 = por %p77, %p78
    %p80 = scmp.ne.s32.totalorder %s68, %s69
    %p81 = scmp.eq.s32.totalorder %s17, 1
    %p82 = por %p80, %p81
    %p84 = scmp.ne.s32.totalorder %s69, %s83
    %p85 = scmp.eq.s32.totalorder %s17, 0
    %p86 = por %p84, %p85
    %s87 = ssub.s32 %s11, %s18
    %p88 = scmp.eq.s32.totalorder %s87, 0
    %s90 = sadd.s32 %s89, 1
    %s91 = scalar_select %p88, %s89, %s90
    %p94 = pneg %p88
    %p95 = scmp.eq.s32.totalorder %s11, 1
    %p96 = por %p94, %p95
    %p97 = scmp.ne.s32.totalorder %s89, %s92
    %p98 = scmp.eq.s32.totalorder %s11, 0
    %p99 = por %p97, %p98
    %p100 = scmp.ne.s32.totalorder %s89, %s92
    %p101 = scmp.eq.s32.totalorder %s16, 1
    %p102 = por %p100, %p101
    %p103 = scmp.ne.s32.totalorder %s92, %s93
    %p104 = scmp.eq.s32.totalorder %s16, 0
    %p105 = por %p103, %p104
    %p106 = scmp.ne.s32.totalorder %s92, %s93
    %p107 = scmp.eq.s32.totalorder %s17, 1
    %p108 = por %p106, %p107
    %p110 = scmp.ne.s32.totalorder %s93, %s109
    %p111 = scmp.eq.s32.totalorder %s17, 0
    %p112 = por %p110, %p111
    %s113 = ssub.s32 %s11, %s18
    %p114 = scmp.eq.s32.totalorder %s113, 0
    %s116 = sadd.s32 %s115, 1
    %s117 = scalar_select %p114, %s115, %s116
    %p120 = pneg %p114
    %p121 = scmp.eq.s32.totalorder %s11, 1
    %p122 = por %p120, %p121
    %p123 = scmp.ne.s32.totalorder %s115, %s118
    %p124 = scmp.eq.s32.totalorder %s11, 0
    %p125 = por %p123, %p124
    %p126 = scmp.ne.s32.totalorder %s115, %s118
    %p127 = scmp.eq.s32.totalorder %s16, 1
    %p128 = por %p126, %p127
    %p129 = scmp.ne.s32.totalorder %s118, %s119
    %p130 = scmp.eq.s32.totalorder %s16, 0
    %p131 = por %p129, %p130
    %p132 = scmp.ne.s32.totalorder %s118, %s119
    %p133 = scmp.eq.s32.totalorder %s17, 1
    %p134 = por %p132, %p133
    %p136 = scmp.ne.s32.totalorder %s119, %s135
    %p137 = scmp.eq.s32.totalorder %s17, 0
    %p138 = por %p136, %p137
    %p139 = scmp.le.s32.totalorder 1, %s11
    %p140 = scmp.lt.s32.totalorder %s11, 3
    %p141 = pnand %p139, %p140
    %p142 = pneg %p141
    // Predicated region
    $region9: #{tpu_custom_call.1} parent=5 // pred_check
      _
    $region10: #{tpu_custom_call.1} parent=5 // pred_check_branch
      %144 = sbr.rel (%p141) target = $region12
    $region11: #{tpu_custom_call.1} parent=5 // pred_region
      %s145 = ssub.s32 %s11, 1
      // Predicated region
      $region13: #{tpu_custom_call.1} parent=11 // pred_check
        %p146 = pneg %p58
      $region14: #{tpu_custom_call.1} parent=11 // pred_check_branch
        %148 = sbr.rel (%p146) target = $region16
      $region15: #{tpu_custom_call.1} parent=11 // pred_region
        _
      $region16: #{tpu_custom_call.1} parent=11 // pred_fallthru
        _
      // Predicated region
      $region17: #{tpu_custom_call.1} parent=11 // pred_check
        %p149 = pneg %p79
      $region18: #{tpu_custom_call.1} parent=11 // pred_check_branch
        %151 = sbr.rel (%p149) target = $region20
      $region19: #{tpu_custom_call.1} parent=11 // pred_region
        _
      $region20: #{tpu_custom_call.1} parent=11 // pred_fallthru
        _
    $region12: #{tpu_custom_call.1} parent=5 // pred_fallthru
      _
    %p152 = scmp.lt.s32.totalorder %s11, 2
    // Predicated region
    $region21: #{tpu_custom_call.1} parent=5 // pred_check
      %p153 = pneg %p152
    $region22: #{tpu_custom_call.1} parent=5 // pred_check_branch
      %155 = sbr.rel (%p153) target = $region24
    $region23: #{tpu_custom_call.1} parent=5 // pred_region
      // Predicated region
      $region25: #{tpu_custom_call.1} parent=23 // pred_check
        %p156 = pneg %p31
      $region26: #{tpu_custom_call.1} parent=23 // pred_check_branch
        %158 = sbr.rel (%p156) target = $region28
      $region27: #{tpu_custom_call.1} parent=23 // pred_region
        %s159 = smul.u32 32, %s11
        %p160 = scmp.lt.s32.totalorder %s159, 63
        %s161 = scalar_select %p160, %s159, 63
        %s162 = smul.addr %s161, 8
        %s163 = scalar_lea.vmem %s0, %s162
        %s164 = smul.u32 32, %s11
      $region28: #{tpu_custom_call.1} parent=23 // pred_fallthru
        _
    $region24: #{tpu_custom_call.1} parent=5 // pred_fallthru
      _
    %p165 = scmp.le.s32.totalorder 1, %s11
    %p166 = scmp.lt.s32.totalorder %s11, 3
    %p167 = pnand %p165, %p166
    %p168 = pneg %p167
    // Predicated region
    $region29: #{tpu_custom_call.1} parent=5 // pred_check
      _
    $region30: #{tpu_custom_call.1} parent=5 // pred_check_branch
      %170 = sbr.rel (%p167) target = $region32
    $region31: #{tpu_custom_call.1} parent=5 // pred_region
      %s171 = ssub.s32 %s11, 1
      %s172 = smul.u32 32, %s16
      %p173 = scmp.lt.s32.totalorder %s172, 63
      %s174 = scalar_select %p173, %s172, 63
      %s175 = smul.addr %s174, 8
      %s176 = scalar_lea.vmem %s0, %s175
      %p177 = pneg %p37
      %p178 = pneg %p34
      %p179 = pneg %p58
      %p180 = pneg %p55
      %p181 = pneg %p79
      %p182 = pneg %p76
      %p183 = pneg %p105
      %p184 = pneg %p102
      %s185 = smul.u32 32, %s16
      %p186 = scmp.lt.s32.totalorder %s185, 63
      %s187 = scalar_select %p186, %s185, 63
      %s188 = smul.addr %s187, 8
      %s189 = scalar_lea.vmem %s3, %s188
      %p190 = pneg %p131
      %p191 = pneg %p128
      %s192 = smul.u32 32, %s16
      %p193 = scmp.lt.s32.totalorder %s192, 63
      %s194 = scalar_select %p193, %s192, 63
      %s195 = smul.addr %s194, 8
      %s196 = scalar_lea.vmem %s4, %s195
      %s197 = smul.u32 32, %s16
      %p198 = scmp.lt.s32.totalorder %s197, 63
      %s199 = scalar_select %p198, %s197, 63
      %s200 = smul.addr %s199, 8
      %s201 = scalar_lea.vmem %s0, %s200
      %s202 = smul.u32 32, %s16
      %s203 = smul.u32 32, %s16
      %p204 = scmp.lt.s32.totalorder %s203, 63
      %s205 = scalar_select %p204, %s203, 63
      %s206 = smul.addr %s205, 8
      %s207 = scalar_lea.vmem %s3, %s206
      %s208 = smul.u32 32, %s16
      %s209 = smul.u32 32, %s16
      %p210 = scmp.lt.s32.totalorder %s209, 63
      %s211 = scalar_select %p210, %s209, 63
      %s212 = smul.addr %s211, 8
      %s213 = scalar_lea.vmem %s4, %s212
      %s214 = smul.u32 32, %s16
      %v215 = vld [vmem:[%s201] sm:$0xff]
      %v216 = vld [vmem:[%s201 + $0x8] sm:$0xff]
      %v217 = vld [vmem:[%s201 + $0x10] sm:$0xff]
      %v218 = vld [vmem:[%s201 + $0x18] sm:$0xff]
      %v219 = vld [vmem:[%s201 + $0x20] sm:$0xff]
      %v220 = vld [vmem:[%s201 + $0x28] sm:$0xff]
      %v221 = vld [vmem:[%s201 + $0x30] sm:$0xff]
      %v222 = vld [vmem:[%s201 + $0x38] sm:$0xff]
      %v223 = vld [vmem:[%s201 + $0x40] sm:$0xff]
      %v224 = vld [vmem:[%s201 + $0x48] sm:$0xff]
      %v225 = vld [vmem:[%s201 + $0x50] sm:$0xff]
      %v226 = vld [vmem:[%s201 + $0x58] sm:$0xff]
      %v227 = vld [vmem:[%s201 + $0x60] sm:$0xff]
      %v228 = vld [vmem:[%s201 + $0x68] sm:$0xff]
      %v229 = vld [vmem:[%s201 + $0x70] sm:$0xff]
      %v230 = vld [vmem:[%s201 + $0x78] sm:$0xff]
      %v231 = vld [vmem:[%s201 + $0x80] sm:$0xff]
      %v232 = vld [vmem:[%s201 + $0x88] sm:$0xff]
      %v233 = vld [vmem:[%s201 + $0x90] sm:$0xff]
      %v234 = vld [vmem:[%s201 + $0x98] sm:$0xff]
      %v235 = vld [vmem:[%s201 + $0xa0] sm:$0xff]
      %v236 = vld [vmem:[%s201 + $0xa8] sm:$0xff]
      %v237 = vld [vmem:[%s201 + $0xb0] sm:$0xff]
      %v238 = vld [vmem:[%s201 + $0xb8] sm:$0xff]
      %v239 = vld [vmem:[%s201 + $0xc0] sm:$0xff]
      %v240 = vld [vmem:[%s201 + $0xc8] sm:$0xff]
      %v241 = vld [vmem:[%s201 + $0xd0] sm:$0xff]
      %v242 = vld [vmem:[%s201 + $0xd8] sm:$0xff]
      %v243 = vld [vmem:[%s201 + $0xe0] sm:$0xff]
      %v244 = vld [vmem:[%s201 + $0xe8] sm:$0xff]
      %v245 = vld [vmem:[%s201 + $0xf0] sm:$0xff]
      %v246 = vld [vmem:[%s201 + $0xf8] sm:$0xff]
      %v247 = vld [vmem:[%s1] sm:$0xff]
      %vm248 = vcmask 64512
      %v250 = vsel %vm248, %v215, 0
      %v253 = vsel %vm248, %v216, 0
      %v256 = vsel %vm248, %v217, 0
      %v259 = vsel %vm248, %v218, 0
      %v262 = vsel %vm248, %v219, 0
      %v265 = vsel %vm248, %v220, 0
      %v268 = vsel %vm248, %v221, 0
      %v271 = vsel %vm248, %v222, 0
      %v274 = vsel %vm248, %v223, 0
      %v277 = vsel %vm248, %v224, 0
      %v280 = vsel %vm248, %v225, 0
      %v283 = vsel %vm248, %v226, 0
      %v286 = vsel %vm248, %v227, 0
      %v289 = vsel %vm248, %v228, 0
      %v292 = vsel %vm248, %v229, 0
      %v295 = vsel %vm248, %v230, 0
      %v298 = vsel %vm248, %v231, 0
      %v301 = vsel %vm248, %v232, 0
      %v304 = vsel %vm248, %v233, 0
      %v307 = vsel %vm248, %v234, 0
      %v310 = vsel %vm248, %v235, 0
      %v313 = vsel %vm248, %v236, 0
      %v316 = vsel %vm248, %v237, 0
      %v319 = vsel %vm248, %v238, 0
      %v322 = vsel %vm248, %v239, 0
      %v325 = vsel %vm248, %v240, 0
      %v328 = vsel %vm248, %v241, 0
      %v331 = vsel %vm248, %v242, 0
      %v334 = vsel %vm248, %v243, 0
      %v337 = vsel %vm248, %v244, 0
      %v340 = vsel %vm248, %v245, 0
      %v343 = vsel %vm248, %v246, 0
      %345 = vmatprep.subr.mxu0 0.0
      %346 = vmatpush1.msra.mxu0 %v247
      %347 = vmatprep.subr.mxu0 0.0
      %348 = vmatpush1.msra.mxu0 0.0
      %349 = vmatprep.subr.mxu0 0.0
      %350 = vmatpush1.msra.mxu0 0.0
      %351 = vmatprep.subr.mxu0 0.0
      %352 = vmatpush1.msra.mxu0 0.0
      %353 = vmatprep.subr.mxu0 0.0
      %354 = vmatpush1.msra.mxu0 0.0
      %355 = vmatprep.subr.mxu0 0.0
      %356 = vmatpush1.msra.mxu0 0.0
      %357 = vmatprep.subr.mxu0 0.0
      %358 = vmatpush1.msra.mxu0 0.0
      %359 = vmatprep.subr.mxu0 0.0
      %360 = vmatpush1.msra.mxu0 0.0
      %361 = vmatprep.subr.mxu0 0.0
      %362 = vmatpush1.msra.mxu0 0.0
      %363 = vmatprep.subr.mxu0 0.0
      %364 = vmatpush1.msra.mxu0 0.0
      %365 = vmatprep.subr.mxu0 0.0
      %366 = vmatpush1.msra.mxu0 0.0
      %367 = vmatprep.subr.mxu0 0.0
      %368 = vmatpush1.msra.mxu0 0.0
      %369 = vmatprep.subr.mxu0 0.0
      %370 = vmatpush1.msra.mxu0 0.0
      %371 = vmatprep.subr.mxu0 0.0
      %372 = vmatpush1.msra.mxu0 0.0
      %373 = vmatprep.subr.mxu0 0.0
      %374 = vmatpush1.msra.mxu0 0.0
      %375 = vmatprep.subr.mxu0 0.0
      %376 = vmatpush1.msra.mxu0 0.0
      %377 = vmatprep.subr.mxu0 0.0
      %378 = vmatpush1.msra.mxu0 0.0
      %379 = vmatprep.subr.mxu0 0.0
      %380 = vmatpush1.msra.mxu0 0.0
      %381 = vmatprep.subr.mxu0 0.0
      %382 = vmatpush1.msra.mxu0 0.0
      %383 = vmatprep.subr.mxu0 0.0
      %384 = vmatpush1.msra.mxu0 0.0
      %385 = vmatprep.subr.mxu0 0.0
      %386 = vmatpush1.msra.mxu0 0.0
      %387 = vmatprep.subr.mxu0 0.0
      %388 = vmatpush1.msra.mxu0 0.0
      %389 = vmatprep.subr.mxu0 0.0
      %390 = vmatpush1.msra.mxu0 0.0
      %391 = vmatprep.subr.mxu0 0.0
      %392 = vmatpush1.msra.mxu0 0.0
      %393 = vmatprep.subr.mxu0 0.0
      %394 = vmatpush1.msra.mxu0 0.0
      %395 = vmatprep.subr.mxu0 0.0
      %396 = vmatpush1.msra.mxu0 0.0
      %397 = vmatprep.subr.mxu0 0.0
      %398 = vmatpush1.msra.mxu0 0.0
      %399 = vmatprep.subr.mxu0 0.0
      %400 = vmatpush1.msra.mxu0 0.0
      %401 = vmatprep.subr.mxu0 0.0
      %402 = vmatpush1.msra.mxu0 0.0
      %403 = vmatprep.subr.mxu0 0.0
      %404 = vmatpush1.msra.mxu0 0.0
      %405 = vmatprep.subr.mxu0 0.0
      %406 = vmatpush1.msra.mxu0 0.0
      %407 = vmatprep.subr.mxu0 0.0
      %408 = vmatpush1.msra.mxu0 0.0
      %409 = vmatprep.mubr.f32.mxu0 0.0
      %410 = vmatmul.mubr.f32.gmra.mrb[0].mxu0 %v250
      %v411 = vpop.f32.mrb[0].mxu0
      %v412 = vadd.f32 0.0, %v411
      %v413 = vpop.f32.mrb[0].mxu0
      %414 = vmatprep.mubr.f32.mxu0 0.0
      %415 = vmatmul.mubr.f32.gmra.mrb[0].mxu0 %v253
      %v416 = vpop.f32.mrb[0].mxu0
      %v417 = vadd.f32 0.0, %v416
      %v418 = vpop.f32.mrb[0].mxu0
      %419 = vmatprep.mubr.f32.mxu0 0.0
      %420 = vmatmul.mubr.f32.gmra.mrb[0].mxu0 %v256
      %v421 = vpop.f32.mrb[0].mxu0
      %v422 = vadd.f32 0.0, %v421
      %v423 = vpop.f32.mrb[0].mxu0
      %424 = vmatprep.mubr.f32.mxu0 0.0
      %425 = vmatmul.mubr.f32.gmra.mrb[0].mxu0 %v259
      %v426 = vpop.f32.mrb[0].mxu0
      %v427 = vadd.f32 0.0, %v426
      %v428 = vpop.f32.mrb[0].mxu0
      %429 = vmatprep.mubr.f32.mxu0 0.0
      %430 = vmatmul.mubr.f32.gmra.mrb[0].mxu0 %v262
      %v431 = vpop.f32.mrb[0].mxu0
      %v432 = vadd.f32 0.0, %v431
      %v433 = vpop.f32.mrb[0].mxu0
      %434 = vmatprep.mubr.f32.mxu0 0.0
      %435 = vmatmul.mubr.f32.gmra.mrb[0].mxu0 %v265
      %v436 = vpop.f32.mrb[0].mxu0
      %v437 = vadd.f32 0.0, %v436
      %v438 = vpop.f32.mrb[0].mxu0
      %439 = vmatprep.mubr.f32.mxu0 0.0
      %440 = vmatmul.mubr.f32.gmra.mrb[0].mxu0 %v268
      %v441 = vpop.f32.mrb[0].mxu0
      %v442 = vadd.f32 0.0, %v441
      %v443 = vpop.f32.mrb[0].mxu0
      %444 = vmatprep.mubr.f32.mxu0 0.0
      %445 = vmatmul.mubr.f32.gmra.mrb[0].mxu0 %v271
      %v446 = vpop.f32.mrb[0].mxu0
      %v447 = vadd.f32 0.0, %v446
      %v448 = vpop.f32.mrb[0].mxu0
      %449 = vmatprep.mubr.f32.mxu0 0.0
      %450 = vmatmul.mubr.f32.gmra.mrb[0].mxu0 %v274
      %v451 = vpop.f32.mrb[0].mxu0
      %v452 = vadd.f32 0.0, %v451
      %v453 = vpop.f32.mrb[0].mxu0
      %454 = vmatprep.mubr.f32.mxu0 0.0
      %455 = vmatmul.mubr.f32.gmra.mrb[0].mxu0 %v277
      %v456 = vpop.f32.mrb[0].mxu0
      %v457 = vadd.f32 0.0, %v456
      %v458 = vpop.f32.mrb[0].mxu0
      %459 = vmatprep.mubr.f32.mxu0 0.0
      %460 = vmatmul.mubr.f32.gmra.mrb[0].mxu0 %v280
      %v461 = vpop.f32.mrb[0].mxu0
      %v462 = vadd.f32 0.0, %v461
      %v463 = vpop.f32.mrb[0].mxu0
      %464 = vmatprep.mubr.f32.mxu0 0.0
      %465 = vmatmul.mubr.f32.gmra.mrb[0].mxu0 %v283
      %v466 = vpop.f32.mrb[0].mxu0
      %v467 = vadd.f32 0.0, %v466
      %v468 = vpop.f32.mrb[0].mxu0
      %469 = vmatprep.mubr.f32.mxu0 0.0
      %470 = vmatmul.mubr.f32.gmra.mrb[0].mxu0 %v286
      %v471 = vpop.f32.mrb[0].mxu0
      %v472 = vadd.f32 0.0, %v471
      %v473 = vpop.f32.mrb[0].mxu0
      %474 = vmatprep.mubr.f32.mxu0 0.0
      %475 = vmatmul.mubr.f32.gmra.mrb[0].mxu0 %v289
      %v476 = vpop.f32.mrb[0].mxu0
      %v477 = vadd.f32 0.0, %v476
      %v478 = vpop.f32.mrb[0].mxu0
      %479 = vmatprep.mubr.f32.mxu0 0.0
      %480 = vmatmul.mubr.f32.gmra.mrb[0].mxu0 %v292
      %v481 = vpop.f32.mrb[0].mxu0
      %v482 = vadd.f32 0.0, %v481
      %v483 = vpop.f32.mrb[0].mxu0
      %484 = vmatprep.mubr.f32.mxu0 0.0
      %485 = vmatmul.mubr.f32.gmra.mrb[0].mxu0 %v295
      %v486 = vpop.f32.mrb[0].mxu0
      %v487 = vadd.f32 0.0, %v486
      %v488 = vpop.f32.mrb[0].mxu0
      %489 = vmatprep.mubr.f32.mxu0 0.0
      %490 = vmatmul.mubr.f32.gmra.mrb[0].mxu0 %v298
      %v491 = vpop.f32.mrb[0].mxu0
      %v492 = vadd.f32 0.0, %v491
      %v493 = vpop.f32.mrb[0].mxu0
      %494 = vmatprep.mubr.f32.mxu0 0.0
      %495 = vmatmul.mubr.f32.gmra.mrb[0].mxu0 %v301
      %v496 = vpop.f32.mrb[0].mxu0
      %v497 = vadd.f32 0.0, %v496
      %v498 = vpop.f32.mrb[0].mxu0
      %499 = vmatprep.mubr.f32.mxu0 0.0
      %500 = vmatmul.mubr.f32.gmra.mrb[0].mxu0 %v304
      %v501 = vpop.f32.mrb[0].mxu0
      %v502 = vadd.f32 0.0, %v501
      %v503 = vpop.f32.mrb[0].mxu0
      %504 = vmatprep.mubr.f32.mxu0 0.0
      %505 = vmatmul.mubr.f32.gmra.mrb[0].mxu0 %v307
      %v506 = vpop.f32.mrb[0].mxu0
      %v507 = vadd.f32 0.0, %v506
      %v508 = vpop.f32.mrb[0].mxu0
      %509 = vmatprep.mubr.f32.mxu0 0.0
      %510 = vmatmul.mubr.f32.gmra.mrb[0].mxu0 %v310
      %v511 = vpop.f32.mrb[0].mxu0
      %v512 = vadd.f32 0.0, %v511
      %v513 = vpop.f32.mrb[0].mxu0
      %514 = vmatprep.mubr.f32.mxu0 0.0
      %515 = vmatmul.mubr.f32.gmra.mrb[0].mxu0 %v313
      %v516 = vpop.f32.mrb[0].mxu0
      %v517 = vadd.f32 0.0, %v516
      %v518 = vpop.f32.mrb[0].mxu0
      %519 = vmatprep.mubr.f32.mxu0 0.0
      %520 = vmatmul.mubr.f32.gmra.mrb[0].mxu0 %v316
      %v521 = vpop.f32.mrb[0].mxu0
      %v522 = vadd.f32 0.0, %v521
      %v523 = vpop.f32.mrb[0].mxu0
      %524 = vmatprep.mubr.f32.mxu0 0.0
      %525 = vmatmul.mubr.f32.gmra.mrb[0].mxu0 %v319
      %v526 = vpop.f32.mrb[0].mxu0
      %v527 = vadd.f32 0.0, %v526
      %v528 = vpop.f32.mrb[0].mxu0
      %529 = vmatprep.mubr.f32.mxu0 0.0
      %530 = vmatmul.mubr.f32.gmra.mrb[0].mxu0 %v322
      %v531 = vpop.f32.mrb[0].mxu0
      %v532 = vadd.f32 0.0, %v531
      %v533 = vpop.f32.mrb[0].mxu0
      %534 = vmatprep.mubr.f32.mxu0 0.0
      %535 = vmatmul.mubr.f32.gmra.mrb[0].mxu0 %v325
      %v536 = vpop.f32.mrb[0].mxu0
      %v537 = vadd.f32 0.0, %v536
      %v538 = vpop.f32.mrb[0].mxu0
      %539 = vmatprep.mubr.f32.mxu0 0.0
      %540 = vmatmul.mubr.f32.gmra.mrb[0].mxu0 %v328
      %v541 = vpop.f32.mrb[0].mxu0
      %v542 = vadd.f32 0.0, %v541
      %v543 = vpop.f32.mrb[0].mxu0
      %544 = vmatprep.mubr.f32.mxu0 0.0
      %545 = vmatmul.mubr.f32.gmra.mrb[0].mxu0 %v331
      %v546 = vpop.f32.mrb[0].mxu0
      %v547 = vadd.f32 0.0, %v546
      %v548 = vpop.f32.mrb[0].mxu0
      %549 = vmatprep.mubr.f32.mxu0 0.0
      %550 = vmatmul.mubr.f32.gmra.mrb[0].mxu0 %v334
      %v551 = vpop.f32.mrb[0].mxu0
      %v552 = vadd.f32 0.0, %v551
      %v553 = vpop.f32.mrb[0].mxu0
      %554 = vmatprep.mubr.f32.mxu0 0.0
      %555 = vmatmul.mubr.f32.gmra.mrb[0].mxu0 %v337
      %v556 = vpop.f32.mrb[0].mxu0
      %v557 = vadd.f32 0.0, %v556
      %v558 = vpop.f32.mrb[0].mxu0
      %559 = vmatprep.mubr.f32.mxu0 0.0
      %560 = vmatmul.mubr.f32.gmra.mrb[0].mxu0 %v340
      %v561 = vpop.f32.mrb[0].mxu0
      %v562 = vadd.f32 0.0, %v561
      %v563 = vpop.f32.mrb[0].mxu0
      %564 = vmatprep.mubr.f32.mxu0 0.0
      %565 = vmatmul.mubr.f32.gmra.mrb[0].mxu0 %v343
      %v566 = vpop.f32.mrb[0].mxu0
      %v567 = vadd.f32 0.0, %v566
      %v568 = vpop.f32.mrb[0].mxu0
      %569 = vdwg.mxu0
      %vm570 = vcmask 130048
      %571 = vst.msk [vmem:[%s207] sm:$0xff] %vm570, %v412
      %572 = vst.msk [vmem:[%s207 + $0x8] sm:$0xff] %vm570, %v417
      %573 = vst.msk [vmem:[%s207 + $0x10] sm:$0xff] %vm570, %v422
      %574 = vst.msk [vmem:[%s207 + $0x18] sm:$0xff] %vm570, %v427
      %575 = vst.msk [vmem:[%s207 + $0x20] sm:$0xff] %vm570, %v432
      %576 = vst.msk [vmem:[%s207 + $0x28] sm:$0xff] %vm570, %v437
      %577 = vst.msk [vmem:[%s207 + $0x30] sm:$0xff] %vm570, %v442
      %578 = vst.msk [vmem:[%s207 + $0x38] sm:$0xff] %vm570, %v447
      %579 = vst.msk [vmem:[%s207 + $0x40] sm:$0xff] %vm570, %v452
      %580 = vst.msk [vmem:[%s207 + $0x48] sm:$0xff] %vm570, %v457
      %581 = vst.msk [vmem:[%s207 + $0x50] sm:$0xff] %vm570, %v462
      %582 = vst.msk [vmem:[%s207 + $0x58] sm:$0xff] %vm570, %v467
      %583 = vst.msk [vmem:[%s207 + $0x60] sm:$0xff] %vm570, %v472
      %584 = vst.msk [vmem:[%s207 + $0x68] sm:$0xff] %vm570, %v477
      %585 = vst.msk [vmem:[%s207 + $0x70] sm:$0xff] %vm570, %v482
      %586 = vst.msk [vmem:[%s207 + $0x78] sm:$0xff] %vm570, %v487
      %587 = vst.msk [vmem:[%s207 + $0x80] sm:$0xff] %vm570, %v492
      %588 = vst.msk [vmem:[%s207 + $0x88] sm:$0xff] %vm570, %v497
      %589 = vst.msk [vmem:[%s207 + $0x90] sm:$0xff] %vm570, %v502
      %590 = vst.msk [vmem:[%s207 + $0x98] sm:$0xff] %vm570, %v507
      %591 = vst.msk [vmem:[%s207 + $0xa0] sm:$0xff] %vm570, %v512
      %592 = vst.msk [vmem:[%s207 + $0xa8] sm:$0xff] %vm570, %v517
      %593 = vst.msk [vmem:[%s207 + $0xb0] sm:$0xff] %vm570, %v522
      %594 = vst.msk [vmem:[%s207 + $0xb8] sm:$0xff] %vm570, %v527
      %595 = vst.msk [vmem:[%s207 + $0xc0] sm:$0xff] %vm570, %v532
      %596 = vst.msk [vmem:[%s207 + $0xc8] sm:$0xff] %vm570, %v537
      %597 = vst.msk [vmem:[%s207 + $0xd0] sm:$0xff] %vm570, %v542
      %598 = vst.msk [vmem:[%s207 + $0xd8] sm:$0xff] %vm570, %v547
      %599 = vst.msk [vmem:[%s207 + $0xe0] sm:$0xff] %vm570, %v552
      %600 = vst.msk [vmem:[%s207 + $0xe8] sm:$0xff] %vm570, %v557
      %601 = vst.msk [vmem:[%s207 + $0xf0] sm:$0xff] %vm570, %v562
      %602 = vst.msk [vmem:[%s207 + $0xf8] sm:$0xff] %vm570, %v567
      %v603 = vld [vmem:[%s2] sm:$0xff]
      %v604 = vld [vmem:[%s2 + $0x8] sm:$0xff]
      %v606 = vsel %vm570, %v412, 0
      %v609 = vsel %vm570, %v417, 0
      %v612 = vsel %vm570, %v422, 0
      %v615 = vsel %vm570, %v427, 0
      %v618 = vsel %vm570, %v432, 0
      %v621 = vsel %vm570, %v437, 0
      %v624 = vsel %vm570, %v442, 0
      %v627 = vsel %vm570, %v447, 0
      %v630 = vsel %vm570, %v452, 0
      %v633 = vsel %vm570, %v457, 0
      %v636 = vsel %vm570, %v462, 0
      %v639 = vsel %vm570, %v467, 0
      %v642 = vsel %vm570, %v472, 0
      %v645 = vsel %vm570, %v477, 0
      %v648 = vsel %vm570, %v482, 0
      %v651 = vsel %vm570, %v487, 0
      %v654 = vsel %vm570, %v492, 0
      %v657 = vsel %vm570, %v497, 0
      %v660 = vsel %vm570, %v502, 0
      %v663 = vsel %vm570, %v507, 0
      %v666 = vsel %vm570, %v512, 0
      %v669 = vsel %vm570, %v517, 0
      %v672 = vsel %vm570, %v522, 0
      %v675 = vsel %vm570, %v527, 0
      %v678 = vsel %vm570, %v532, 0
      %v681 = vsel %vm570, %v537, 0
      %v684 = vsel %vm570, %v542, 0
      %v687 = vsel %vm570, %v547, 0
      %v690 = vsel %vm570, %v552, 0
      %v693 = vsel %vm570, %v557, 0
      %v696 = vsel %vm570, %v562, 0
      %v699 = vsel %vm570, %v567, 0
      %701 = vmatprep.subr.mxu0 0.0
      %702 = vmatpush1.msra.mxu0 %v603
      %703 = vmatprep.subr.mxu0 0.0
      %704 = vmatpush1.msra.mxu0 %v604
      %705 = vmatprep.subr.mxu0 0.0
      %706 = vmatpush1.msra.mxu0 0.0
      %707 = vmatprep.subr.mxu0 0.0
      %708 = vmatpush1.msra.mxu0 0.0
      %709 = vmatprep.subr.mxu0 0.0
      %710 = vmatpush1.msra.mxu0 0.0
      %711 = vmatprep.subr.mxu0 0.0
      %712 = vmatpush1.msra.mxu0 0.0
      %713 = vmatprep.subr.mxu0 0.0
      %714 = vmatpush1.msra.mxu0 0.0
      %715 = vmatprep.subr.mxu0 0.0
      %716 = vmatpush1.msra.mxu0 0.0
      %717 = vmatprep.subr.mxu0 0.0
      %718 = vmatpush1.msra.mxu0 0.0
      %719 = vmatprep.subr.mxu0 0.0
      %720 = vmatpush1.msra.mxu0 0.0
      %721 = vmatprep.subr.mxu0 0.0
      %722 = vmatpush1.msra.mxu0 0.0
      %723 = vmatprep.subr.mxu0 0.0
      %724 = vmatpush1.msra.mxu0 0.0
      %725 = vmatprep.subr.mxu0 0.0
      %726 = vmatpush1.msra.mxu0 0.0
      %727 = vmatprep.subr.mxu0 0.0
      %728 = vmatpush1.msra.mxu0 0.0
      %729 = vmatprep.subr.mxu0 0.0
      %730 = vmatpush1.msra.mxu0 0.0
      %731 = vmatprep.subr.mxu0 0.0
      %732 = vmatpush1.msra.mxu0 0.0
      %733 = vmatprep.subr.mxu0 0.0
      %734 = vmatpush1.msra.mxu0 0.0
      %735 = vmatprep.subr.mxu0 0.0
      %736 = vmatpush1.msra.mxu0 0.0
      %737 = vmatprep.subr.mxu0 0.0
      %738 = vmatpush1.msra.mxu0 0.0
      %739 = vmatprep.subr.mxu0 0.0
      %740 = vmatpush1.msra.mxu0 0.0
      %741 = vmatprep.subr.mxu0 0.0
      %742 = vmatpush1.msra.mxu0 0.0
      %743 = vmatprep.subr.mxu0 0.0
      %744 = vmatpush1.msra.mxu0 0.0
      %745 = vmatprep.subr.mxu0 0.0
      %746 = vmatpush1.msra.mxu0 0.0
      %747 = vmatprep.subr.mxu0 0.0
      %748 = vmatpush1.msra.mxu0 0.0
      %749 = vmatprep.subr.mxu0 0.0
      %750 = vmatpush1.msra.mxu0 0.0
      %751 = vmatprep.subr.mxu0 0.0
      %752 = vmatpush1.msra.mxu0 0.0
      %753 = vmatprep.subr.mxu0 0.0
      %754 = vmatpush1.msra.mxu0 0.0
      %755 = vmatprep.subr.mxu0 0.0
      %756 = vmatpush1.msra.mxu0 0.0
      %757 = vmatprep.subr.mxu0 0.0
      %758 = vmatpush1.msra.mxu0 0.0
      %759 = vmatprep.subr.mxu0 0.0
      %760 = vmatpush1.msra.mxu0 0.0
      %761 = vmatprep.subr.mxu0 0.0
      %762 = vmatpush1.msra.mxu0 0.0
      %763 = vmatprep.subr.mxu0 0.0
      %764 = vmatpush1.msra.mxu0 0.0
      %765 = vmatprep.mubr.f32.mxu0 0.0
      %766 = vmatmul.mubr.f32.gmra.mrb[0].mxu0 %v606
      %v767 = vpop.f32.mrb[0].mxu0
      %v768 = vadd.f32 0.0, %v767
      %v769 = vpop.f32.mrb[0].mxu0
      %770 = vmatprep.mubr.f32.mxu0 0.0
      %771 = vmatmul.mubr.f32.gmra.mrb[0].mxu0 %v609
      %v772 = vpop.f32.mrb[0].mxu0
      %v773 = vadd.f32 0.0, %v772
      %v774 = vpop.f32.mrb[0].mxu0
      %775 = vmatprep.mubr.f32.mxu0 0.0
      %776 = vmatmul.mubr.f32.gmra.mrb[0].mxu0 %v612
      %v777 = vpop.f32.mrb[0].mxu0
      %v778 = vadd.f32 0.0, %v777
      %v779 = vpop.f32.mrb[0].mxu0
      %780 = vmatprep.mubr.f32.mxu0 0.0
      %781 = vmatmul.mubr.f32.gmra.mrb[0].mxu0 %v615
      %v782 = vpop.f32.mrb[0].mxu0
      %v783 = vadd.f32 0.0, %v782
      %v784 = vpop.f32.mrb[0].mxu0
      %785 = vmatprep.mubr.f32.mxu0 0.0
      %786 = vmatmul.mubr.f32.gmra.mrb[0].mxu0 %v618
      %v787 = vpop.f32.mrb[0].mxu0
      %v788 = vadd.f32 0.0, %v787
      %v789 = vpop.f32.mrb[0].mxu0
      %790 = vmatprep.mubr.f32.mxu0 0.0
      %791 = vmatmul.mubr.f32.gmra.mrb[0].mxu0 %v621
      %v792 = vpop.f32.mrb[0].mxu0
      %v793 = vadd.f32 0.0, %v792
      %v794 = vpop.f32.mrb[0].mxu0
      %795 = vmatprep.mubr.f32.mxu0 0.0
      %796 = vmatmul.mubr.f32.gmra.mrb[0].mxu0 %v624
      %v797 = vpop.f32.mrb[0].mxu0
      %v798 = vadd.f32 0.0, %v797
      %v799 = vpop.f32.mrb[0].mxu0
      %800 = vmatprep.mubr.f32.mxu0 0.0
      %801 = vmatmul.mubr.f32.gmra.mrb[0].mxu0 %v627
      %v802 = vpop.f32.mrb[0].mxu0
      %v803 = vadd.f32 0.0, %v802
      %v804 = vpop.f32.mrb[0].mxu0
      %805 = vmatprep.mubr.f32.mxu0 0.0
      %806 = vmatmul.mubr.f32.gmra.mrb[0].mxu0 %v630
      %v807 = vpop.f32.mrb[0].mxu0
      %v808 = vadd.f32 0.0, %v807
      %v809 = vpop.f32.mrb[0].mxu0
      %810 = vmatprep.mubr.f32.mxu0 0.0
      %811 = vmatmul.mubr.f32.gmra.mrb[0].mxu0 %v633
      %v812 = vpop.f32.mrb[0].mxu0
      %v813 = vadd.f32 0.0, %v812
      %v814 = vpop.f32.mrb[0].mxu0
      %815 = vmatprep.mubr.f32.mxu0 0.0
      %816 = vmatmul.mubr.f32.gmra.mrb[0].mxu0 %v636
      %v817 = vpop.f32.mrb[0].mxu0
      %v818 = vadd.f32 0.0, %v817
      %v819 = vpop.f32.mrb[0].mxu0
      %820 = vmatprep.mubr.f32.mxu0 0.0
      %821 = vmatmul.mubr.f32.gmra.mrb[0].mxu0 %v639
      %v822 = vpop.f32.mrb[0].mxu0
      %v823 = vadd.f32 0.0, %v822
      %v824 = vpop.f32.mrb[0].mxu0
      %825 = vmatprep.mubr.f32.mxu0 0.0
      %826 = vmatmul.mubr.f32.gmra.mrb[0].mxu0 %v642
      %v827 = vpop.f32.mrb[0].mxu0
      %v828 = vadd.f32 0.0, %v827
      %v829 = vpop.f32.mrb[0].mxu0
      %830 = vmatprep.mubr.f32.mxu0 0.0
      %831 = vmatmul.mubr.f32.gmra.mrb[0].mxu0 %v645
      %v832 = vpop.f32.mrb[0].mxu0
      %v833 = vadd.f32 0.0, %v832
      %v834 = vpop.f32.mrb[0].mxu0
      %835 = vmatprep.mubr.f32.mxu0 0.0
      %836 = vmatmul.mubr.f32.gmra.mrb[0].mxu0 %v648
      %v837 = vpop.f32.mrb[0].mxu0
      %v838 = vadd.f32 0.0, %v837
      %v839 = vpop.f32.mrb[0].mxu0
      %840 = vmatprep.mubr.f32.mxu0 0.0
      %841 = vmatmul.mubr.f32.gmra.mrb[0].mxu0 %v651
      %v842 = vpop.f32.mrb[0].mxu0
      %v843 = vadd.f32 0.0, %v842
      %v844 = vpop.f32.mrb[0].mxu0
      %845 = vmatprep.mubr.f32.mxu0 0.0
      %846 = vmatmul.mubr.f32.gmra.mrb[0].mxu0 %v654
      %v847 = vpop.f32.mrb[0].mxu0
      %v848 = vadd.f32 0.0, %v847
      %v849 = vpop.f32.mrb[0].mxu0
      %850 = vmatprep.mubr.f32.mxu0 0.0
      %851 = vmatmul.mubr.f32.gmra.mrb[0].mxu0 %v657
      %v852 = vpop.f32.mrb[0].mxu0
      %v853 = vadd.f32 0.0, %v852
      %v854 = vpop.f32.mrb[0].mxu0
      %855 = vmatprep.mubr.f32.mxu0 0.0
      %856 = vmatmul.mubr.f32.gmra.mrb[0].mxu0 %v660
      %v857 = vpop.f32.mrb[0].mxu0
      %v858 = vadd.f32 0.0, %v857
      %v859 = vpop.f32.mrb[0].mxu0
      %860 = vmatprep.mubr.f32.mxu0 0.0
      %861 = vmatmul.mubr.f32.gmra.mrb[0].mxu0 %v663
      %v862 = vpop.f32.mrb[0].mxu0
      %v863 = vadd.f32 0.0, %v862
      %v864 = vpop.f32.mrb[0].mxu0
      %865 = vmatprep.mubr.f32.mxu0 0.0
      %866 = vmatmul.mubr.f32.gmra.mrb[0].mxu0 %v666
      %v867 = vpop.f32.mrb[0].mxu0
      %v868 = vadd.f32 0.0, %v867
      %v869 = vpop.f32.mrb[0].mxu0
      %870 = vmatprep.mubr.f32.mxu0 0.0
      %871 = vmatmul.mubr.f32.gmra.mrb[0].mxu0 %v669
      %v872 = vpop.f32.mrb[0].mxu0
      %v873 = vadd.f32 0.0, %v872
      %v874 = vpop.f32.mrb[0].mxu0
      %875 = vmatprep.mubr.f32.mxu0 0.0
      %876 = vmatmul.mubr.f32.gmra.mrb[0].mxu0 %v672
      %v877 = vpop.f32.mrb[0].mxu0
      %v878 = vadd.f32 0.0, %v877
      %v879 = vpop.f32.mrb[0].mxu0
      %880 = vmatprep.mubr.f32.mxu0 0.0
      %881 = vmatmul.mubr.f32.gmra.mrb[0].mxu0 %v675
      %v882 = vpop.f32.mrb[0].mxu0
      %v883 = vadd.f32 0.0, %v882
      %v884 = vpop.f32.mrb[0].mxu0
      %885 = vmatprep.mubr.f32.mxu0 0.0
      %886 = vmatmul.mubr.f32.gmra.mrb[0].mxu0 %v678
      %v887 = vpop.f32.mrb[0].mxu0
      %v888 = vadd.f32 0.0, %v887
      %v889 = vpop.f32.mrb[0].mxu0
      %890 = vmatprep.mubr.f32.mxu0 0.0
      %891 = vmatmul.mubr.f32.gmra.mrb[0].mxu0 %v681
      %v892 = vpop.f32.mrb[0].mxu0
      %v893 = vadd.f32 0.0, %v892
      %v894 = vpop.f32.mrb[0].mxu0
      %895 = vmatprep.mubr.f32.mxu0 0.0
      %896 = vmatmul.mubr.f32.gmra.mrb[0].mxu0 %v684
      %v897 = vpop.f32.mrb[0].mxu0
      %v898 = vadd.f32 0.0, %v897
      %v899 = vpop.f32.mrb[0].mxu0
      %900 = vmatprep.mubr.f32.mxu0 0.0
      %901 = vmatmul.mubr.f32.gmra.mrb[0].mxu0 %v687
      %v902 = vpop.f32.mrb[0].mxu0
      %v903 = vadd.f32 0.0, %v902
      %v904 = vpop.f32.mrb[0].mxu0
      %905 = vmatprep.mubr.f32.mxu0 0.0
      %906 = vmatmul.mubr.f32.gmra.mrb[0].mxu0 %v690
      %v907 = vpop.f32.mrb[0].mxu0
      %v908 = vadd.f32 0.0, %v907
      %v909 = vpop.f32.mrb[0].mxu0
      %910 = vmatprep.mubr.f32.mxu0 0.0
      %911 = vmatmul.mubr.f32.gmra.mrb[0].mxu0 %v693
      %v912 = vpop.f32.mrb[0].mxu0
      %v913 = vadd.f32 0.0, %v912
      %v914 = vpop.f32.mrb[0].mxu0
      %915 = vmatprep.mubr.f32.mxu0 0.0
      %916 = vmatmul.mubr.f32.gmra.mrb[0].mxu0 %v696
      %v917 = vpop.f32.mrb[0].mxu0
      %v918 = vadd.f32 0.0, %v917
      %v919 = vpop.f32.mrb[0].mxu0
      %920 = vmatprep.mubr.f32.mxu0 0.0
      %921 = vmatmul.mubr.f32.gmra.mrb[0].mxu0 %v699
      %v922 = vpop.f32.mrb[0].mxu0
      %v923 = vadd.f32 0.0, %v922
      %v924 = vpop.f32.mrb[0].mxu0
      %925 = vdwg.mxu0
      %vm926 = vcmask 31744
      %927 = vst.msk [vmem:[%s213] sm:$0xff] %vm926, %v768
      %928 = vst.msk [vmem:[%s213 + $0x8] sm:$0xff] %vm926, %v773
      %929 = vst.msk [vmem:[%s213 + $0x10] sm:$0xff] %vm926, %v778
      %930 = vst.msk [vmem:[%s213 + $0x18] sm:$0xff] %vm926, %v783
      %931 = vst.msk [vmem:[%s213 + $0x20] sm:$0xff] %vm926, %v788
      %932 = vst.msk [vmem:[%s213 + $0x28] sm:$0xff] %vm926, %v793
      %933 = vst.msk [vmem:[%s213 + $0x30] sm:$0xff] %vm926, %v798
      %934 = vst.msk [vmem:[%s213 + $0x38] sm:$0xff] %vm926, %v803
      %935 = vst.msk [vmem:[%s213 + $0x40] sm:$0xff] %vm926, %v808
      %936 = vst.msk [vmem:[%s213 + $0x48] sm:$0xff] %vm926, %v813
      %937 = vst.msk [vmem:[%s213 + $0x50] sm:$0xff] %vm926, %v818
      %938 = vst.msk [vmem:[%s213 + $0x58] sm:$0xff] %vm926, %v823
      %939 = vst.msk [vmem:[%s213 + $0x60] sm:$0xff] %vm926, %v828
      %940 = vst.msk [vmem:[%s213 + $0x68] sm:$0xff] %vm926, %v833
      %941 = vst.msk [vmem:[%s213 + $0x70] sm:$0xff] %vm926, %v838
      %942 = vst.msk [vmem:[%s213 + $0x78] sm:$0xff] %vm926, %v843
      %943 = vst.msk [vmem:[%s213 + $0x80] sm:$0xff] %vm926, %v848
      %944 = vst.msk [vmem:[%s213 + $0x88] sm:$0xff] %vm926, %v853
      %945 = vst.msk [vmem:[%s213 + $0x90] sm:$0xff] %vm926, %v858
      %946 = vst.msk [vmem:[%s213 + $0x98] sm:$0xff] %vm926, %v863
      %947 = vst.msk [vmem:[%s213 + $0xa0] sm:$0xff] %vm926, %v868
      %948 = vst.msk [vmem:[%s213 + $0xa8] sm:$0xff] %vm926, %v873
      %949 = vst.msk [vmem:[%s213 + $0xb0] sm:$0xff] %vm926, %v878
      %950 = vst.msk [vmem:[%s213 + $0xb8] sm:$0xff] %vm926, %v883
      %951 = vst.msk [vmem:[%s213 + $0xc0] sm:$0xff] %vm926, %v888
      %952 = vst.msk [vmem:[%s213 + $0xc8] sm:$0xff] %vm926, %v893
      %953 = vst.msk [vmem:[%s213 + $0xd0] sm:$0xff] %vm926, %v898
      %954 = vst.msk [vmem:[%s213 + $0xd8] sm:$0xff] %vm926, %v903
      %955 = vst.msk [vmem:[%s213 + $0xe0] sm:$0xff] %vm926, %v908
      %956 = vst.msk [vmem:[%s213 + $0xe8] sm:$0xff] %vm926, %v913
      %957 = vst.msk [vmem:[%s213 + $0xf0] sm:$0xff] %vm926, %v918
      %958 = vst.msk [vmem:[%s213 + $0xf8] sm:$0xff] %vm926, %v923
      %s959 = smul.u32 32, %s16
      %p960 = scmp.lt.s32.totalorder %s959, 63
      %s961 = scalar_select %p960, %s959, 63
      %s962 = smul.addr %s961, 8
      %s963 = scalar_lea.vmem %s3, %s962
      %s964 = smul.u32 32, %s16
      %p965 = scmp.lt.s32.totalorder %s964, 63
      %s966 = scalar_select %p965, %s964, 63
      %s967 = smul.addr %s966, 8
      %s968 = scalar_lea.vmem %s4, %s967
      // Predicated region
      $region33: #{tpu_custom_call.1} parent=31 // pred_check
        %p969 = pneg %p102
      $region34: #{tpu_custom_call.1} parent=31 // pred_check_branch
        %971 = sbr.rel (%p969) target = $region36
      $region35: #{tpu_custom_call.1} parent=31 // pred_region
        %s972 = smul.u32 32, %s16
      $region36: #{tpu_custom_call.1} parent=31 // pred_fallthru
        _
      // Predicated region
      $region37: #{tpu_custom_call.1} parent=31 // pred_check
        %p973 = pneg %p128
      $region38: #{tpu_custom_call.1} parent=31 // pred_check_branch
        %975 = sbr.rel (%p973) target = $region40
      $region39: #{tpu_custom_call.1} parent=31 // pred_region
        %s976 = smul.u32 32, %s16
      $region40: #{tpu_custom_call.1} parent=31 // pred_fallthru
        _
    $region32: #{tpu_custom_call.1} parent=5 // pred_fallthru
      _
    %p977 = scmp.le.s32.totalorder 2, %s11
    // Predicated region
    $region41: #{tpu_custom_call.1} parent=5 // pred_check
      %p978 = pneg %p977
    $region42: #{tpu_custom_call.1} parent=5 // pred_check_branch
      %980 = sbr.rel (%p978) target = $region44
    $region43: #{tpu_custom_call.1} parent=5 // pred_region
      %s981 = ssub.s32 %s11, 2
      // Predicated region
      $region45: #{tpu_custom_call.1} parent=43 // pred_check
        %p982 = pneg %p108
      $region46: #{tpu_custom_call.1} parent=43 // pred_check_branch
        %984 = sbr.rel (%p982) target = $region48
      $region47: #{tpu_custom_call.1} parent=43 // pred_region
        %s985 = smul.u32 32, %s17
        %p986 = scmp.lt.s32.totalorder %s985, 63
        %s987 = scalar_select %p986, %s985, 63
        %s988 = smul.addr %s987, 8
        %s989 = scalar_lea.vmem %s3, %s988
      $region48: #{tpu_custom_call.1} parent=43 // pred_fallthru
        _
      // Predicated region
      $region49: #{tpu_custom_call.1} parent=43 // pred_check
        %p990 = pneg %p134
      $region50: #{tpu_custom_call.1} parent=43 // pred_check_branch
        %992 = sbr.rel (%p990) target = $region52
      $region51: #{tpu_custom_call.1} parent=43 // pred_region
        %s993 = smul.u32 32, %s17
        %p994 = scmp.lt.s32.totalorder %s993, 63
        %s995 = scalar_select %p994, %s993, 63
        %s996 = smul.addr %s995, 8
        %s997 = scalar_lea.vmem %s4, %s996
      $region52: #{tpu_custom_call.1} parent=43 // pred_fallthru
        _
    $region44: #{tpu_custom_call.1} parent=5 // pred_fallthru
      _
  $region6: #{tpu_custom_call.1} parent=0 // loop_footer
    %s15 = sadd.s32 1, %s11
  $region7: #{tpu_custom_call.1} parent=0 // loop_footer_branch
    %10 = sbr.rel target = $region3
  $region8: #{tpu_custom_call.1} parent=0 // loop_exit
    _

</llo_original>
